<compile_context>
chip_gen: v7x
topology: tpu7x:2x2x1
jax: 0.10.0
libtpu: 0.0.40
codegen_flags: <defaults>
</compile_context>

<pallas_src>
import numpy as np
import jax
import jax.numpy as jnp
from jax.experimental import pallas as pl
from jax.experimental.pallas import tpu as pltpu


_TARGET_BLOCK_BYTES = 2 * 1024 * 1024   # ~2 MiB per x/out block (sized for v7x's 64 MiB VMEM)
_FLAT_SINGLE_BLOCK_VMEM = 24 * 1024 * 1024  # budget for the un-tiled (full-N) flat path


def make_sinusoid_table(n_position: int, d_hid: int) -> jnp.ndarray:
    """Deterministic sinusoid position-encoding table, shape (n_position, d_hid)."""
    pos = np.arange(n_position, dtype=np.float64)[:, None]           # (P, 1)
    hid = np.arange(d_hid, dtype=np.float64)[None, :]                # (1, D)
    angle = pos / np.power(10000.0, 2.0 * (hid // 2) / d_hid)        # (P, D)
    table = np.empty_like(angle)
    table[:, 0::2] = np.sin(angle[:, 0::2])
    table[:, 1::2] = np.cos(angle[:, 1::2])
    return jnp.asarray(table, dtype=jnp.float32)


def _pe_add_kernel(x_ref, pos_ref, o_ref):
    # Flat path:  x_ref (TB, TN),   pos_ref (1, TN)  -> broadcast over batch (sublane) axis.
    # 3-D path:   x_ref (1, TS, D), pos_ref (TS, D)  -> broadcast over leading batch axis.
    o_ref[...] = (x_ref[...] + pos_ref[...]).astype(o_ref.dtype)


def _largest_divisor_multiple(total: int, unit: int, cap: int) -> int:
    """Largest multiple of `unit` that divides `total` and is <= cap (at least `unit`).
    Assumes `unit` divides `total`."""
    best = unit
    k = 2
    limit = min(cap, total)
    while k * unit <= limit:
        if total % (k * unit) == 0:
            best = k * unit
        k += 1
    return min(best, total)


def _flat_tiles(B: int, N: int, itemsize: int, target_elems: int):
    """Pick (tb, tn) tile sizes for the flattened (B, N) view, or None if not representable."""
    # Sublane tile: a multiple of 8 dividing B, or the full batch dim.
    tb = B if (B <= 8 or B % 8 != 0) else 8

    if N % 128 == 0:
        tn = _largest_divisor_multiple(N, 128, max(128, target_elems // tb))
        # Grow the batch tile if the block is still small (amortize per-grid-step overhead).
        if B % 8 == 0 and B > tb:
            tb = _largest_divisor_multiple(B, 8, max(8, target_elems // tn))
        return tb, tn

    # N not lane-aligned: only a full-extent feature block is legal (block dim == array dim
    # bypasses the (8,128) rule).  Use it if double-buffered blocks fit the VMEM budget.
    if B % 8 == 0:
        tb = _largest_divisor_multiple(B, 8, max(8, target_elems // N))
    vmem_bytes = (4 * tb * N + 2 * N) * itemsize  # 2x(in) + 2x(out) + 2x(pos)
    if vmem_bytes <= _FLAT_SINGLE_BLOCK_VMEM:
        return tb, N
    return None


def positional_encoding(x: jnp.ndarray, pos_table: jnp.ndarray) -> jnp.ndarray:
    """x: (B, S, D); pos_table: (n_position, D) with S <= n_position. Returns x + pos[None, :S]."""
    B, S, D = x.shape
    n_position, d_hid = pos_table.shape
    if d_hid != D:
        raise ValueError(f"pos_table hidden dim {d_hid} != x hidden dim {D}")
    if S > n_position:
        raise ValueError(f"sequence length {S} exceeds n_position {n_position}")

    dtype = x.dtype
    itemsize = jnp.dtype(dtype).itemsize
    pos = pos_table[:S, :].astype(dtype)  # match x dtype (halves HBM traffic for bf16 models)

    target_elems = max(128, _TARGET_BLOCK_BYTES // itemsize)

    cost = pl.CostEstimate(
        flops=B * S * D,
        transcendentals=0,
        bytes_accessed=(2 * B * S * D + S * D) * itemsize,
    )
    cparams = pltpu.CompilerParams(
        dimension_semantics=("parallel", "parallel"),
        vmem_limit_bytes=48 * 1024 * 1024,
    )

    N = S * D
    tiles = _flat_tiles(B, N, itemsize, target_elems)
    if tiles is not None:
        # ---- Lane-dense path: view (S, D) as a single flat feature axis of width N. ----
        tb, tn = tiles
        xf = x.reshape(B, N)
        posf = pos.reshape(1, N)
        out = pl.pallas_call(
            _pe_add_kernel,
            out_shape=jax.ShapeDtypeStruct((B, N), dtype),
            grid_spec=pltpu.PrefetchScalarGridSpec(
                num_scalar_prefetch=0,
                # Feature tile is the outer axis so the shared pos block stays resident
                # across the inner batch loop (Pallas skips the re-fetch when the block
                # index is unchanged between consecutive steps).
                grid=(N // tn, B // tb),
                in_specs=[
                    pl.BlockSpec((tb, tn), lambda j, i: (i, j)),   # x tile
                    pl.BlockSpec((1, tn), lambda j, i: (0, j)),    # shared pos tile
                ],
                out_specs=pl.BlockSpec((tb, tn), lambda j, i: (i, j)),
            ),
            compiler_params=cparams,
            cost_estimate=cost,
        )(xf, posf)
        return out.reshape(B, S, D)

    # ---- Fallback (S*D not lane-aligned AND too large for a full-N block): keep (B, S, D),
    #      tile the sequence axis. ----
    # TODO(synk): this path keeps D as the lane axis; D < 128 here still lowers to masked stores.
    ts = S if (S <= 8 or S % 8 != 0) else _largest_divisor_multiple(
        S, 8, max(8, target_elems // D))
    return pl.pallas_call(
        _pe_add_kernel,
        out_shape=jax.ShapeDtypeStruct((B, S, D), dtype),
        grid_spec=pltpu.PrefetchScalarGridSpec(
            num_scalar_prefetch=0,
            grid=(S // ts, B),
            in_specs=[
                pl.BlockSpec((1, ts, D), lambda j, b: (b, j, 0)),  # x tile
                pl.BlockSpec((ts, D), lambda j, b: (j, 0)),        # shared pos tile
            ],
            out_specs=pl.BlockSpec((1, ts, D), lambda j, b: (b, j, 0)),
        ),
        compiler_params=cparams,
        cost_estimate=cost,
    )(x, pos)


if __name__ == "__main__":
    # Small shapes consistent with the module's forward: (B, S, d_hid)
    B, S, D = 2, 8, 32
    n_position = 16  # module default is 2; use >= S so the slice is meaningful

    key = jax.random.PRNGKey(0)
    x = jax.random.normal(key, (B, S, D), dtype=jnp.float32)

    pos_table = make_sinusoid_table(n_position, D)

    out = positional_encoding(x, pos_table)
    out = jax.block_until_ready(out)

    # Reference check (plain JAX broadcast add — matches PyTorch forward)
    ref = x + pos_table[None, :S, :]
    np.testing.assert_allclose(np.asarray(out), np.asarray(ref), rtol=1e-6, atol=1e-6)

    print("KERNEL_OK")
</pallas_src>

<mosaic_0001>
module attributes {stable_mosaic.version = 11 : i64} {
  func.func @_pe_add_kernel(%arg0: i32, %arg1: i32, %arg2: memref<2x256xf32, #tpu.memory_space<vmem>>, %arg3: memref<1x256xf32, #tpu.memory_space<vmem>>, %arg4: memref<2x256xf32, #tpu.memory_space<vmem>>) attributes {dimension_semantics = [#tpu.dimension_semantics<parallel>, #tpu.dimension_semantics<parallel>], iteration_bounds = array<i64: 1, 1>, scalar_prefetch = 0 : i64, scratch_operands = 0 : i64, tpu.core_type = #tpu.core_type<tc>, window_params = [{transform_indices = @transform_0, window_bounds = array<i64: 2, 256>}, {transform_indices = @transform_1, window_bounds = array<i64: 1, 256>}, {transform_indices = @transform_2, window_bounds = array<i64: 2, 256>}]} {
    %c0 = arith.constant 0 : index
    %c0_0 = arith.constant 0 : index
    %0 = vector.load %arg2[%c0, %c0_0] : memref<2x256xf32, #tpu.memory_space<vmem>>, vector<2x256xf32>
    %c0_1 = arith.constant 0 : index
    %c0_2 = arith.constant 0 : index
    %1 = vector.load %arg3[%c0_1, %c0_2] : memref<1x256xf32, #tpu.memory_space<vmem>>, vector<1x256xf32>
    %2 = vector.broadcast %1 : vector<1x256xf32> to vector<2x256xf32>
    %3 = arith.addf %0, %2 : vector<2x256xf32>
    %c0_3 = arith.constant 0 : index
    %c0_4 = arith.constant 0 : index
    %4 = vector.load %arg4[%c0_3, %c0_4] : memref<2x256xf32, #tpu.memory_space<vmem>>, vector<2x256xf32>
    tpu.vector_store %arg4[%c0_3, %c0_4], %3 {strides = array<i32>} : memref<2x256xf32, #tpu.memory_space<vmem>>, vector<2x256xf32>,
    return
  }
  func.func @transform_0(%arg0: i32, %arg1: i32) -> (i32, i32) {
    %c0_i32 = arith.constant 0 : i32
    return %arg1, %arg0 : i32, i32
  }
  func.func @transform_1(%arg0: i32, %arg1: i32) -> (i32, i32) {
    %c0_i32 = arith.constant 0 : i32
    %c0_i32_0 = arith.constant 0 : i32
    return %c0_i32, %arg0 : i32, i32
  }
  func.func @transform_2(%arg0: i32, %arg1: i32) -> (i32, i32) {
    %c0_i32 = arith.constant 0 : i32
    return %arg1, %arg0 : i32, i32
  }
}

</mosaic_0001>

<llo_original>
// kernel: tpu_custom_call.1
$region0: #{tpu_custom_call.1}
  #allocation0 [shape = 'u32[]', space=smem, size = 0x4, offset = 0x4, fixed_abs, tag = 'smem constant byte address 0x4 - core index']
  #allocation1 [shape = 'u32[144,128]{1,0:T(1,128)}', space=vmem, size = 0x12000, scoped, tag = 'internal scratch']
  %s0 = inlined_call_operand.hbm [shape: f32[2,256], index: 0, kind: input, shape index: {}]
  %s1 = inlined_call_operand.vmem [shape: f32[1,256], index: 1, kind: input, shape index: {}]
  %s2 = inlined_call_operand.hbm [shape: f32[2,256], index: 2, kind: output, shape index: {}]
  %s3 = sld [smem:[#allocation0]]
  $region22: #{tpu_custom_call.1} parent=0
    _
  %s5 = ssub.s32 1, %s3
  %s6 = scalar_select 0, %s5, %s3
  $region1: #{tpu_custom_call.1} parent=0
    #allocation2 [shape = 'u8[2048]{0}', space=vmem, size = 0x800, scoped, tag = 'input window, operand 0, single buffered']
    #allocation3 [shape = 's32[1]{0}', space=sflag, size = 0x4, scoped, tag = 'scoped memory for tpu_custom_call.1']
    #allocation4 [shape = 's32[1]{0}', space=sflag, size = 0x4, scoped, tag = 'scoped memory for tpu_custom_call.1']
    #allocation5 [shape = 'u8[2048]{0}', space=vmem, size = 0x800, scoped, tag = 'output window, operand 0, single buffered']
    %7 = vsyncpa [#allocation3], 0
    %8 = vsyncpa [#allocation4], 0
    // Predicated region
    $region2: #{tpu_custom_call.1} parent=1 // pred_check
      _
    $region3: #{tpu_custom_call.1} parent=1 // pred_check_branch
      %10 = sbr.rel (0) target = $region5
    $region4: #{tpu_custom_call.1} parent=1 // pred_region
      %s12 = ssub.s32 64, 64
      %13 = vsyncadd [#allocation3], %s12
      %s15 = sshll.u32 [#allocation2], 4
      %s16 = int_to_ptr.vmem [resolvable:$true] %s15
      %18 = dma.hbm_to_vmem [thread:$0]  %s0, 64, %s16, [#allocation3]
    $region5: #{tpu_custom_call.1} parent=1 // pred_fallthru
      _
    // Predicated region
    $region6: #{tpu_custom_call.1} parent=1 // pred_check
      _
    $region7: #{tpu_custom_call.1} parent=1 // pred_check_branch
      %20 = sbr.rel (0) target = $region9
    $region8: #{tpu_custom_call.1} parent=1 // pred_region
      _
    $region9: #{tpu_custom_call.1} parent=1 // pred_fallthru
      _
    // Predicated region
    $region10: #{tpu_custom_call.1} parent=1 // pred_check
      _
    $region11: #{tpu_custom_call.1} parent=1 // pred_check_branch
      %22 = sbr.rel (0) target = $region13
    $region12: #{tpu_custom_call.1} parent=1 // pred_region
      %23 = dma.done [#allocation3], 64
    $region13: #{tpu_custom_call.1} parent=1 // pred_fallthru
      _
    %v24 = vld [vmem:[#allocation2] sm:$0xf]
    %v25 = vld [vmem:[%s1] sm:$0x3]
    %v27 = vlaneseq
    %v28 = vshrl.u32 %v27, 7
    %v29 = vsub.s32 0, %v28
    %v30 = vrot.slane %v25, %v29
    %v31 = vlaneseq
    %v32 = vshrl.u32 %v31, 7
    %v33 = vsub.s32 1, %v32
    %v34 = vrot.slane %v25, %v33
    %v35 = vcombine.low %v30, %v34
    %v37 = vunpack.c.l.s4 1983009808
    %v38 = vunpack.c.0.s8 %v37
    %v39 = vlaneseq
    %v40 = vshrl.u32 %v39, 7
    %v41 = vsub.s32 %v38, %v40
    %v42 = vrot.slane %v35, %v41
    %v44 = vadd.f32 %v24, %v42
    %45 = vst [vmem:[#allocation5] sm:$0xf] %v44
    // Predicated region
    $region14: #{tpu_custom_call.1} parent=1 // pred_check
      _
    $region15: #{tpu_custom_call.1} parent=1 // pred_check_branch
      %47 = sbr.rel (0) target = $region17
    $region16: #{tpu_custom_call.1} parent=1 // pred_region
      %s49 = ssub.s32 64, 64
      %50 = vsyncadd [#allocation4], %s49
      %s52 = sshll.u32 [#allocation5], 4
      %s53 = int_to_ptr.vmem [resolvable:$true] %s52
      %55 = dma.vmem_to_hbm [thread:$0]  %s53, 64, %s2, [#allocation4]
    $region17: #{tpu_custom_call.1} parent=1 // pred_fallthru
      _
    // Predicated region
    $region18: #{tpu_custom_call.1} parent=1 // pred_check
      _
    $region19: #{tpu_custom_call.1} parent=1 // pred_check_branch
      %57 = sbr.rel (0) target = $region21
    $region20: #{tpu_custom_call.1} parent=1 // pred_region
      %58 = dma.done [#allocation4], 64
    $region21: #{tpu_custom_call.1} parent=1 // pred_fallthru
      _
    %59 = vsyncpa [#allocation3], 1
    %60 = vsyncpa [#allocation4], 1

</llo_original>
